<compile_context>
chip_gen: v5e
topology: v5e:2x2
jax: 0.10.0
libtpu: 0.0.40
codegen_flags: <defaults>
</compile_context>

<pallas_src>
import jax
import jax.numpy as jnp
from jax import lax
from jax.experimental import pallas as pl
from jax.experimental.pallas import tpu as pltpu

IN_PAD = 8        # state dim 4 zero-padded to 8 (sublane multiple, full-array last dim)
HID = 128         # hidden width of each head
FUSED = 2 * HID   # actor || critic hidden, 256
OUT_PAD = 8       # lanes 0-1 = action probs, lane 2 = value, lanes 3-7 = junk (never read)
TILE_B = 128      # batch rows per grid step
NEG_BIG = -1e30


def a2c_kernel(x_ref, w1_ref, b1_ref, w2_ref, b2_ref, out_ref):
    # x: (TILE_B, 8) f32 zero-padded states
    # w1: (8, 256) bf16 = [w1_actor | w1_critic];  b1: (1, 256) f32
    # w2: (256, 8) bf16 block-diagonal (cols 0-1 actor head, col 2 critic head); b2: (1, 8) f32
    x = x_ref[...].astype(jnp.bfloat16)

    # ---- fused layer 1 (actor || critic) + ReLU: one MXU pass, f32 accumulate ----
    h = jnp.dot(x, w1_ref[...], preferred_element_type=jnp.float32) + b1_ref[...]
    h = jnp.maximum(h, 0.0)                                    # (TILE_B, 256) f32

    # ---- fused block-diagonal layer 2: one MXU pass -> (TILE_B, 8) ----
    z = jnp.dot(h.astype(jnp.bfloat16), w2_ref[...],
                preferred_element_type=jnp.float32) + b2_ref[...]

    # ---- exact masked softmax over the 2 actor lanes ----
    lane = lax.broadcasted_iota(jnp.int32, z.shape, 1)
    actor_mask = lane < 2
    scores = jnp.where(actor_mask, z, NEG_BIG)
    m = jnp.max(scores, axis=-1, keepdims=True)
    e = jnp.where(actor_mask, jnp.exp(scores - m), 0.0)
    denom = jnp.sum(e, axis=-1, keepdims=True)
    probs = e / denom                                          # exact: probs sum to 1

    # lanes 0-1: softmax probs; lane 2: raw critic value; lanes 3-7: don't care.
    # NOTE: consumers MUST slice lanes 0:3 (the wrapper does).
    out_ref[...] = jnp.where(actor_mask, probs, z)


def pack_a2c_params(params):
    """ONE-TIME packing of actor/critic params into fused, MXU-friendly tensors.

    Call this once when the weights change, not per forward call.
    """
    w1a, b1a, w2a, b2a, w1c, b1c, w2c, b2c = params

    w1 = jnp.zeros((IN_PAD, FUSED), jnp.float32)
    w1 = w1.at[:4, :HID].set(w1a).at[:4, HID:].set(w1c)        # (8, 256)
    b1 = jnp.concatenate([b1a, b1c], axis=-1)                  # (1, 256)

    w2 = jnp.zeros((FUSED, OUT_PAD), jnp.float32)
    w2 = w2.at[:HID, 0:2].set(w2a).at[HID:, 2:3].set(w2c)      # (256, 8) block-diagonal
    b2 = jnp.zeros((1, OUT_PAD), jnp.float32)
    b2 = b2.at[:, 0:2].set(b2a).at[:, 2:3].set(b2c)            # (1, 8)

    # bf16 matmul operands; biases stay f32 (added to the f32 MXU accumulator).
    return (w1.astype(jnp.bfloat16), b1, w2.astype(jnp.bfloat16), b2)


@jax.jit
def a2c_forward(x, packed):
    """x: (B, 4) f32. packed: output of pack_a2c_params. Returns (probs (B,2), values (B,1))."""
    w1, b1, w2, b2 = packed
    B = x.shape[0]
    B_pad = ((B + TILE_B - 1) // TILE_B) * TILE_B

    # Only per-call prep: pad states to (B_pad, 8). Tiny (32 B/row).
    x_pad = jnp.zeros((B_pad, IN_PAD), jnp.float32).at[:B, :4].set(x.astype(jnp.float32))

    slab = pl.pallas_call(
        a2c_kernel,
        out_shape=jax.ShapeDtypeStruct((B_pad, OUT_PAD), jnp.float32),
        grid=(B_pad // TILE_B,),
        in_specs=[
            pl.BlockSpec((TILE_B, IN_PAD), lambda i: (i, 0)),
            pl.BlockSpec((IN_PAD, FUSED), lambda i: (0, 0)),
            pl.BlockSpec((1, FUSED), lambda i: (0, 0)),
            pl.BlockSpec((FUSED, OUT_PAD), lambda i: (0, 0)),
            pl.BlockSpec((1, OUT_PAD), lambda i: (0, 0)),
        ],
        out_specs=pl.BlockSpec((TILE_B, OUT_PAD), lambda i: (i, 0)),
        compiler_params=pltpu.CompilerParams(dimension_semantics=("parallel",)),
    )(x_pad, w1, b1, w2, b2)

    probs = slab[:B, 0:2]
    values = slab[:B, 2:3]
    return probs, values


def init_params(key):
    """Deterministic init mimicking torch.nn.Linear default (U[-1/sqrt(fan_in), +])."""
    ks = jax.random.split(key, 8)

    def lin(kw, kb, fan_in, fan_out):
        bound = 1.0 / jnp.sqrt(jnp.float32(fan_in))
        w = jax.random.uniform(kw, (fan_in, fan_out), jnp.float32, -bound, bound)
        b = jax.random.uniform(kb, (1, fan_out), jnp.float32, -bound, bound)
        return w, b

    # actor: Linear(4,128) -> Linear(128,2)
    w1a, b1a = lin(ks[0], ks[1], 4, 128)
    w2a, b2a = lin(ks[2], ks[3], 128, 2)
    # critic: Linear(4,128) -> Linear(128,1)
    w1c, b1c = lin(ks[4], ks[5], 4, 128)
    w2c, b2c = lin(ks[6], ks[7], 128, 1)
    return (w1a, b1a, w2a, b2a, w1c, b1c, w2c, b2c)


if __name__ == "__main__":
    key = jax.random.PRNGKey(0)
    k_x, k_p = jax.random.split(key)

    B = 256                                   # two 128-row tiles -> exercises the parallel grid
    x = jax.random.normal(k_x, (B, 4), jnp.float32)
    params = init_params(k_p)
    packed = pack_a2c_params(params)          # one-time packing, out of the hot path

    probs, values = a2c_forward(x, packed)
    jax.block_until_ready((probs, values))

    # ---- sanity checks vs. pure-JAX reference with the same bf16-rounded matmul operands ----
    w1a, b1a, w2a, b2a, w1c, b1c, w2c, b2c = params
    bf = lambda a: a.astype(jnp.bfloat16).astype(jnp.float32)
    xb = bf(x)
    ha = jnp.maximum(xb @ bf(w1a) + b1a, 0.0)
    ref_probs = jax.nn.softmax(bf(ha) @ bf(w2a) + b2a, axis=-1)
    hc = jnp.maximum(xb @ bf(w1c) + b1c, 0.0)
    ref_values = bf(hc) @ bf(w2c) + b2c

    assert probs.shape == (B, 2) and values.shape == (B, 1)
    assert jnp.allclose(probs, ref_probs, atol=2e-3)
    assert jnp.allclose(values, ref_values, atol=2e-3)
    assert jnp.allclose(jnp.sum(probs, axis=-1), 1.0, atol=1e-5)   # exact divide -> sums to 1

    print("KERNEL_OK")
</pallas_src>

<mosaic_0001>
module attributes {stable_mosaic.version = 11 : i64} {
  func.func @a2c_kernel(%arg0: i32, %arg1: memref<128x8xf32, #tpu.memory_space<vmem>>, %arg2: memref<8x256xbf16, #tpu.memory_space<vmem>>, %arg3: memref<1x256xf32, #tpu.memory_space<vmem>>, %arg4: memref<256x8xbf16, #tpu.memory_space<vmem>>, %arg5: memref<1x8xf32, #tpu.memory_space<vmem>>, %arg6: memref<128x8xf32, #tpu.memory_space<vmem>>) attributes {dimension_semantics = [#tpu.dimension_semantics<parallel>], iteration_bounds = array<i64: 2>, scalar_prefetch = 0 : i64, scratch_operands = 0 : i64, tpu.core_type = #tpu.core_type<tc>, window_params = [{transform_indices = @transform_0, window_bounds = array<i64: 128, 8>}, {pipeline_mode = #tpu.pipeline_mode<synchronous>, transform_indices = @transform_1, window_bounds = array<i64: 8, 256>}, {pipeline_mode = #tpu.pipeline_mode<synchronous>, transform_indices = @transform_2, window_bounds = array<i64: 1, 256>}, {pipeline_mode = #tpu.pipeline_mode<synchronous>, transform_indices = @transform_3, window_bounds = array<i64: 256, 8>}, {pipeline_mode = #tpu.pipeline_mode<synchronous>, transform_indices = @transform_4, window_bounds = array<i64: 1, 8>}, {transform_indices = @transform_5, window_bounds = array<i64: 128, 8>}]} {
    %c0 = arith.constant 0 : index
    %c0_0 = arith.constant 0 : index
    %0 = vector.load %arg1[%c0, %c0_0] : memref<128x8xf32, #tpu.memory_space<vmem>>, vector<128x8xf32>
    %1 = arith.truncf %0 : vector<128x8xf32> to vector<128x8xbf16>
    %c0_1 = arith.constant 0 : index
    %c0_2 = arith.constant 0 : index
    %2 = vector.load %arg2[%c0_1, %c0_2] : memref<8x256xbf16, #tpu.memory_space<vmem>>, vector<8x256xbf16>
    %cst = arith.constant dense<0.000000e+00> : vector<128x256xf32>
    %3 = tpu.matmul %1, %2, %cst {dimension_numbers = #tpu.dot_dimension_numbers<[1], [0], [0], [1], [0, 0, 1, 1], [], []>} : vector<128x8xbf16>, vector<8x256xbf16>, vector<128x256xf32> -> vector<128x256xf32>
    %c0_3 = arith.constant 0 : index
    %c0_4 = arith.constant 0 : index
    %4 = vector.load %arg3[%c0_3, %c0_4] : memref<1x256xf32, #tpu.memory_space<vmem>>, vector<1x256xf32>
    %5 = vector.broadcast %4 : vector<1x256xf32> to vector<128x256xf32>
    %6 = arith.addf %3, %5 : vector<128x256xf32>
    %cst_5 = arith.constant 0.000000e+00 : f32
    %7 = vector.broadcast %cst_5 : f32 to vector<128x256xf32>
    %8 = arith.maximumf %6, %7 : vector<128x256xf32>
    %9 = arith.truncf %8 : vector<128x256xf32> to vector<128x256xbf16>
    %c0_6 = arith.constant 0 : index
    %c0_7 = arith.constant 0 : index
    %10 = vector.load %arg4[%c0_6, %c0_7] : memref<256x8xbf16, #tpu.memory_space<vmem>>, vector<256x8xbf16>
    %cst_8 = arith.constant dense<0.000000e+00> : vector<128x8xf32>
    %11 = tpu.matmul %9, %10, %cst_8 {dimension_numbers = #tpu.dot_dimension_numbers<[1], [0], [0], [1], [0, 0, 1, 1], [], []>} : vector<128x256xbf16>, vector<256x8xbf16>, vector<128x8xf32> -> vector<128x8xf32>
    %c0_9 = arith.constant 0 : index
    %c0_10 = arith.constant 0 : index
    %12 = vector.load %arg5[%c0_9, %c0_10] : memref<1x8xf32, #tpu.memory_space<vmem>>, vector<1x8xf32>
    %13 = vector.broadcast %12 : vector<1x8xf32> to vector<128x8xf32>
    %14 = arith.addf %11, %13 : vector<128x8xf32>
    %15 = tpu.iota {dimensions = array<i32: 1>} : vector<128x8xi32>
    %c2_i32 = arith.constant 2 : i32
    %16 = vector.broadcast %c2_i32 : i32 to vector<128x8xi32>
    %17 = arith.cmpi slt, %15, %16 : vector<128x8xi32>
    %cst_11 = arith.constant -1.000000e+30 : f32
    %18 = vector.broadcast %cst_11 : f32 to vector<128x8xf32>
    %19 = arith.select %17, %14, %18 : vector<128x8xi1>, vector<128x8xf32>
    %cst_12 = arith.constant dense<0xFF800000> : vector<128xf32>
    %20 = vector.multi_reduction <maximumf>, %19, %cst_12 [1] : vector<128x8xf32> to vector<128xf32>
    %21 = vector.shape_cast %20 : vector<128xf32> to vector<128x1xf32>
    %22 = vector.broadcast %21 : vector<128x1xf32> to vector<128x8xf32>
    %23 = arith.subf %19, %22 : vector<128x8xf32>
    %24 = math.exp %23 : vector<128x8xf32>
    %cst_13 = arith.constant 0.000000e+00 : f32
    %25 = vector.broadcast %cst_13 : f32 to vector<128x8xf32>
    %26 = arith.select %17, %24, %25 : vector<128x8xi1>, vector<128x8xf32>
    %cst_14 = arith.constant dense<0.000000e+00> : vector<128xf32>
    %27 = vector.multi_reduction <add>, %26, %cst_14 [1] : vector<128x8xf32> to vector<128xf32>
    %28 = vector.shape_cast %27 : vector<128xf32> to vector<128x1xf32>
    %29 = vector.broadcast %28 : vector<128x1xf32> to vector<128x8xf32>
    %30 = arith.divf %26, %29 : vector<128x8xf32>
    %31 = arith.select %17, %30, %14 : vector<128x8xi1>, vector<128x8xf32>
    %c0_15 = arith.constant 0 : index
    %c0_16 = arith.constant 0 : index
    %32 = vector.load %arg6[%c0_15, %c0_16] : memref<128x8xf32, #tpu.memory_space<vmem>>, vector<128x8xf32>
    tpu.vector_store %arg6[%c0_15, %c0_16], %31 {strides = array<i32>} : memref<128x8xf32, #tpu.memory_space<vmem>>, vector<128x8xf32>,
    return
  }
  func.func @transform_0(%arg0: i32) -> (i32, i32) {
    %c0_i32 = arith.constant 0 : i32
    %c0_i32_0 = arith.constant 0 : i32
    return %arg0, %c0_i32 : i32, i32
  }
  func.func @transform_1(%arg0: i32) -> (i32, i32) {
    %c0_i32 = arith.constant 0 : i32
    %c0_i32_0 = arith.constant 0 : i32
    %c0_i32_1 = arith.constant 0 : i32
    return %c0_i32, %c0_i32_0 : i32, i32
  }
  func.func @transform_2(%arg0: i32) -> (i32, i32) {
    %c0_i32 = arith.constant 0 : i32
    %c0_i32_0 = arith.constant 0 : i32
    %c0_i32_1 = arith.constant 0 : i32
    return %c0_i32, %c0_i32_0 : i32, i32
  }
  func.func @transform_3(%arg0: i32) -> (i32, i32) {
    %c0_i32 = arith.constant 0 : i32
    %c0_i32_0 = arith.constant 0 : i32
    %c0_i32_1 = arith.constant 0 : i32
    return %c0_i32, %c0_i32_0 : i32, i32
  }
  func.func @transform_4(%arg0: i32) -> (i32, i32) {
    %c0_i32 = arith.constant 0 : i32
    %c0_i32_0 = arith.constant 0 : i32
    %c0_i32_1 = arith.constant 0 : i32
    return %c0_i32, %c0_i32_0 : i32, i32
  }
  func.func @transform_5(%arg0: i32) -> (i32, i32) {
    %c0_i32 = arith.constant 0 : i32
    %c0_i32_0 = arith.constant 0 : i32
    return %arg0, %c0_i32 : i32, i32
  }
}

</mosaic_0001>

<llo_original>
// kernel: a2c_forward.1
$region0: #{a2c_forward.1}
  #allocation0 [shape = 'u32[]', space=smem, size = 0x4, offset = 0x4, fixed_abs, tag = 'smem constant byte address 0x4 - core index']
  #allocation1 [shape = 'u32[72,128]{1,0:T(1,128)}', space=vmem, size = 0x9000, scoped, tag = 'internal scratch']
  %s0 = inlined_call_operand.vmem [shape: f32[256,8], index: 0, kind: input, shape index: {}]
  %s1 = inlined_call_operand.vmem [shape: bf16[8,256], index: 1, kind: input, shape index: {}]
  %s2 = inlined_call_operand.vmem [shape: f32[1,256], index: 2, kind: input, shape index: {}]
  %s3 = inlined_call_operand.vmem [shape: bf16[256,8], index: 3, kind: input, shape index: {}]
  %s4 = inlined_call_operand.vmem [shape: f32[1,8], index: 4, kind: input, shape index: {}]
  %s5 = inlined_call_operand.vmem [shape: f32[256,8], index: 5, kind: output, shape index: {}]
  %s6 = sld [smem:[#allocation0]]
  $region53: #{a2c_forward.1} parent=0
    _
  %s8 = ssub.s32 1, %s6
  %s9 = scalar_select 0, %s8, %s6
  loop: start=0, step=1, limit=4
  $region2: #{a2c_forward.1} parent=0 // loop_pre_header
    _
  $region3: #{a2c_forward.1} parent=0 // loop_header
    %s11 = sphi 0, %s15
    %p12 = scmp.ge.s32.totalorder %s11, 4
    %s21 = sphi 0, %s23
    %s24 = sphi 0, %s21
    %s25 = sphi 0, %s24
    %s41 = sphi 0, %s25
    %s45 = sphi 0, %s45
    %s47 = sphi 0, %s45
    %s48 = sphi 0, %s47
    %s62 = sphi 0, %s48
    %s66 = sphi 0, %s66
    %s68 = sphi 0, %s66
    %s69 = sphi 0, %s68
    %s83 = sphi 0, %s69
    %s87 = sphi 0, %s87
    %s89 = sphi 0, %s87
    %s90 = sphi 0, %s89
    %s104 = sphi 0, %s90
    %s108 = sphi 0, %s108
    %s110 = sphi 0, %s108
    %s111 = sphi 0, %s110
    %s125 = sphi 0, %s111
    %s131 = sphi 0, %s133
    %s134 = sphi 0, %s131
    %s135 = sphi 0, %s134
    %s151 = sphi 0, %s135
  $region4: #{a2c_forward.1} parent=0 // loop_header_branch
    %14 = sbr.rel (%p12) target = $region8
  $region5: #{a2c_forward.1} parent=0 // loop_body
    %s16 = ssub.s32 %s11, 1
    %s17 = ssub.s32 %s11, 2
    %s18 = sadd.s32 %s11, 1
    %s19 = ssub.s32 %s11, %s18
    %p20 = scmp.eq.s32.totalorder %s19, 0
    %s22 = sadd.s32 %s21, 1
    %s23 = scalar_select %p20, %s21, %s22
    %p26 = pneg %p20
    %p27 = scmp.eq.s32.totalorder %s11, 1
    %p28 = por %p26, %p27
    %p29 = scmp.ne.s32.totalorder %s21, %s24
    %p30 = scmp.eq.s32.totalorder %s11, 0
    %p31 = por %p29, %p30
    %p32 = scmp.ne.s32.totalorder %s21, %s24
    %p33 = scmp.eq.s32.totalorder %s16, 1
    %p34 = por %p32, %p33
    %p35 = scmp.ne.s32.totalorder %s24, %s25
    %p36 = scmp.eq.s32.totalorder %s16, 0
    %p37 = por %p35, %p36
    %p38 = scmp.ne.s32.totalorder %s24, %s25
    %p39 = scmp.eq.s32.totalorder %s17, 1
    %p40 = por %p38, %p39
    %p42 = scmp.ne.s32.totalorder %s25, %s41
    %p43 = scmp.eq.s32.totalorder %s17, 0
    %p44 = por %p42, %p43
    %s46 = sadd.s32 %s45, 1
    %p49 = scmp.eq.s32.totalorder %s11, 1
    %p50 = scmp.ne.s32.totalorder %s45, %s47
    %p51 = scmp.eq.s32.totalorder %s11, 0
    %p52 = por %p50, %p51
    %p53 = scmp.ne.s32.totalorder %s45, %s47
    %p54 = scmp.eq.s32.totalorder %s16, 1
    %p55 = por %p53, %p54
    %p56 = scmp.ne.s32.totalorder %s47, %s48
    %p57 = scmp.eq.s32.totalorder %s16, 0
    %p58 = por %p56, %p57
    %p59 = scmp.ne.s32.totalorder %s47, %s48
    %p60 = scmp.eq.s32.totalorder %s17, 1
    %p61 = por %p59, %p60
    %p63 = scmp.ne.s32.totalorder %s48, %s62
    %p64 = scmp.eq.s32.totalorder %s17, 0
    %p65 = por %p63, %p64
    %s67 = sadd.s32 %s66, 1
    %p70 = scmp.eq.s32.totalorder %s11, 1
    %p71 = scmp.ne.s32.totalorder %s66, %s68
    %p72 = scmp.eq.s32.totalorder %s11, 0
    %p73 = por %p71, %p72
    %p74 = scmp.ne.s32.totalorder %s66, %s68
    %p75 = scmp.eq.s32.totalorder %s16, 1
    %p76 = por %p74, %p75
    %p77 = scmp.ne.s32.totalorder %s68, %s69
    %p78 = scmp.eq.s32.totalorder %s16, 0
    %p79 = por %p77, %p78
    %p80 = scmp.ne.s32.totalorder %s68, %s69
    %p81 = scmp.eq.s32.totalorder %s17, 1
    %p82 = por %p80, %p81
    %p84 = scmp.ne.s32.totalorder %s69, %s83
    %p85 = scmp.eq.s32.totalorder %s17, 0
    %p86 = por %p84, %p85
    %s88 = sadd.s32 %s87, 1
    %p91 = scmp.eq.s32.totalorder %s11, 1
    %p92 = scmp.ne.s32.totalorder %s87, %s89
    %p93 = scmp.eq.s32.totalorder %s11, 0
    %p94 = por %p92, %p93
    %p95 = scmp.ne.s32.totalorder %s87, %s89
    %p96 = scmp.eq.s32.totalorder %s16, 1
    %p97 = por %p95, %p96
    %p98 = scmp.ne.s32.totalorder %s89, %s90
    %p99 = scmp.eq.s32.totalorder %s16, 0
    %p100 = por %p98, %p99
    %p101 = scmp.ne.s32.totalorder %s89, %s90
    %p102 = scmp.eq.s32.totalorder %s17, 1
    %p103 = por %p101, %p102
    %p105 = scmp.ne.s32.totalorder %s90, %s104
    %p106 = scmp.eq.s32.totalorder %s17, 0
    %p107 = por %p105, %p106
    %s109 = sadd.s32 %s108, 1
    %p112 = scmp.eq.s32.totalorder %s11, 1
    %p113 = scmp.ne.s32.totalorder %s108, %s110
    %p114 = scmp.eq.s32.totalorder %s11, 0
    %p115 = por %p113, %p114
    %p116 = scmp.ne.s32.totalorder %s108, %s110
    %p117 = scmp.eq.s32.totalorder %s16, 1
    %p118 = por %p116, %p117
    %p119 = scmp.ne.s32.totalorder %s110, %s111
    %p120 = scmp.eq.s32.totalorder %s16, 0
    %p121 = por %p119, %p120
    %p122 = scmp.ne.s32.totalorder %s110, %s111
    %p123 = scmp.eq.s32.totalorder %s17, 1
    %p124 = por %p122, %p123
    %p126 = scmp.ne.s32.totalorder %s111, %s125
    %p127 = scmp.eq.s32.totalorder %s17, 0
    %p128 = por %p126, %p127
    %s129 = ssub.s32 %s11, %s18
    %p130 = scmp.eq.s32.totalorder %s129, 0
    %s132 = sadd.s32 %s131, 1
    %s133 = scalar_select %p130, %s131, %s132
    %p136 = pneg %p130
    %p137 = scmp.eq.s32.totalorder %s11, 1
    %p138 = por %p136, %p137
    %p139 = scmp.ne.s32.totalorder %s131, %s134
    %p140 = scmp.eq.s32.totalorder %s11, 0
    %p141 = por %p139, %p140
    %p142 = scmp.ne.s32.totalorder %s131, %s134
    %p143 = scmp.eq.s32.totalorder %s16, 1
    %p144 = por %p142, %p143
    %p145 = scmp.ne.s32.totalorder %s134, %s135
    %p146 = scmp.eq.s32.totalorder %s16, 0
    %p147 = por %p145, %p146
    %p148 = scmp.ne.s32.totalorder %s134, %s135
    %p149 = scmp.eq.s32.totalorder %s17, 1
    %p150 = por %p148, %p149
    %p152 = scmp.ne.s32.totalorder %s135, %s151
    %p153 = scmp.eq.s32.totalorder %s17, 0
    %p154 = por %p152, %p153
    %p155 = scmp.le.s32.totalorder 1, %s11
    %p156 = scmp.lt.s32.totalorder %s11, 3
    %p157 = pnand %p155, %p156
    %p158 = pneg %p157
    // Predicated region
    $region9: #{a2c_forward.1} parent=5 // pred_check
      _
    $region10: #{a2c_forward.1} parent=5 // pred_check_branch
      %160 = sbr.rel (%p157) target = $region12
    $region11: #{a2c_forward.1} parent=5 // pred_region
      %s161 = ssub.s32 %s11, 1
      // Predicated region
      $region13: #{a2c_forward.1} parent=11 // pred_check
        %p162 = pneg %p58
      $region14: #{a2c_forward.1} parent=11 // pred_check_branch
        %164 = sbr.rel (%p162) target = $region16
      $region15: #{a2c_forward.1} parent=11 // pred_region
        _
      $region16: #{a2c_forward.1} parent=11 // pred_fallthru
        _
      // Predicated region
      $region17: #{a2c_forward.1} parent=11 // pred_check
        %p165 = pneg %p79
      $region18: #{a2c_forward.1} parent=11 // pred_check_branch
        %167 = sbr.rel (%p165) target = $region20
      $region19: #{a2c_forward.1} parent=11 // pred_region
        _
      $region20: #{a2c_forward.1} parent=11 // pred_fallthru
        _
      // Predicated region
      $region21: #{a2c_forward.1} parent=11 // pred_check
        %p168 = pneg %p100
      $region22: #{a2c_forward.1} parent=11 // pred_check_branch
        %170 = sbr.rel (%p168) target = $region24
      $region23: #{a2c_forward.1} parent=11 // pred_region
        _
      $region24: #{a2c_forward.1} parent=11 // pred_fallthru
        _
      // Predicated region
      $region25: #{a2c_forward.1} parent=11 // pred_check
        %p171 = pneg %p121
      $region26: #{a2c_forward.1} parent=11 // pred_check_branch
        %173 = sbr.rel (%p171) target = $region28
      $region27: #{a2c_forward.1} parent=11 // pred_region
        _
      $region28: #{a2c_forward.1} parent=11 // pred_fallthru
        _
    $region12: #{a2c_forward.1} parent=5 // pred_fallthru
      _
    %p174 = scmp.lt.s32.totalorder %s11, 2
    // Predicated region
    $region29: #{a2c_forward.1} parent=5 // pred_check
      %p175 = pneg %p174
    $region30: #{a2c_forward.1} parent=5 // pred_check_branch
      %177 = sbr.rel (%p175) target = $region32
    $region31: #{a2c_forward.1} parent=5 // pred_region
      // Predicated region
      $region33: #{a2c_forward.1} parent=31 // pred_check
        %p178 = pneg %p31
      $region34: #{a2c_forward.1} parent=31 // pred_check_branch
        %180 = sbr.rel (%p178) target = $region36
      $region35: #{a2c_forward.1} parent=31 // pred_region
        %s181 = smul.u32 16, %s11
        %p182 = scmp.lt.s32.totalorder %s181, 31
        %s183 = scalar_select %p182, %s181, 31
        %s184 = smul.addr %s183, 8
        %s185 = scalar_lea.vmem %s0, %s184
        %s186 = smul.u32 16, %s11
      $region36: #{a2c_forward.1} parent=31 // pred_fallthru
        _
    $region32: #{a2c_forward.1} parent=5 // pred_fallthru
      _
    %p187 = scmp.le.s32.totalorder 1, %s11
    %p188 = scmp.lt.s32.totalorder %s11, 3
    %p189 = pnand %p187, %p188
    %p190 = pneg %p189
    // Predicated region
    $region37: #{a2c_forward.1} parent=5 // pred_check
      _
    $region38: #{a2c_forward.1} parent=5 // pred_check_branch
      %192 = sbr.rel (%p189) target = $region40
    $region39: #{a2c_forward.1} parent=5 // pred_region
      %s193 = ssub.s32 %s11, 1
      %s194 = smul.u32 16, %s16
      %p195 = scmp.lt.s32.totalorder %s194, 31
      %s196 = scalar_select %p195, %s194, 31
      %s197 = smul.addr %s196, 8
      %s198 = scalar_lea.vmem %s0, %s197
      %p199 = pneg %p37
      %p200 = pneg %p34
      %p201 = pneg %p58
      %p202 = pneg %p55
      %p203 = pneg %p79
      %p204 = pneg %p76
      %p205 = pneg %p100
      %p206 = pneg %p97
      %p207 = pneg %p121
      %p208 = pneg %p118
      %p209 = pneg %p147
      %p210 = pneg %p144
      %s211 = smul.u32 16, %s16
      %p212 = scmp.lt.s32.totalorder %s211, 31
      %s213 = scalar_select %p212, %s211, 31
      %s214 = smul.addr %s213, 8
      %s215 = scalar_lea.vmem %s5, %s214
      %s216 = smul.u32 16, %s16
      %p217 = scmp.lt.s32.totalorder %s216, 31
      %s218 = scalar_select %p217, %s216, 31
      %s219 = smul.addr %s218, 8
      %s220 = scalar_lea.vmem %s0, %s219
      %s221 = smul.u32 16, %s16
      %s222 = smul.u32 16, %s16
      %p223 = scmp.lt.s32.totalorder %s222, 31
      %s224 = scalar_select %p223, %s222, 31
      %s225 = smul.addr %s224, 8
      %s226 = scalar_lea.vmem %s5, %s225
      %s227 = smul.u32 16, %s16
      %v229 = vld [vmem:[%s220] sm:$0xff]
      %v230 = vld [vmem:[%s220 + $0x8] sm:$0xff]
      %v231 = vld [vmem:[%s220 + $0x10] sm:$0xff]
      %v232 = vld [vmem:[%s220 + $0x18] sm:$0xff]
      %v233 = vld [vmem:[%s220 + $0x20] sm:$0xff]
      %v234 = vld [vmem:[%s220 + $0x28] sm:$0xff]
      %v235 = vld [vmem:[%s220 + $0x30] sm:$0xff]
      %v236 = vld [vmem:[%s220 + $0x38] sm:$0xff]
      %v237 = vld [vmem:[%s220 + $0x40] sm:$0xff]
      %v238 = vld [vmem:[%s220 + $0x48] sm:$0xff]
      %v239 = vld [vmem:[%s220 + $0x50] sm:$0xff]
      %v240 = vld [vmem:[%s220 + $0x58] sm:$0xff]
      %v241 = vld [vmem:[%s220 + $0x60] sm:$0xff]
      %v242 = vld [vmem:[%s220 + $0x68] sm:$0xff]
      %v243 = vld [vmem:[%s220 + $0x70] sm:$0xff]
      %v244 = vld [vmem:[%s220 + $0x78] sm:$0xff]
      %v245 = vpack.c.bf16 %v230, %v229
      %v246 = vpack.c.bf16 %v232, %v231
      %v247 = vpack.c.bf16 %v234, %v233
      %v248 = vpack.c.bf16 %v236, %v235
      %v249 = vpack.c.bf16 %v238, %v237
      %v250 = vpack.c.bf16 %v240, %v239
      %v251 = vpack.c.bf16 %v242, %v241
      %v252 = vpack.c.bf16 %v244, %v243
      %v253 = vld [vmem:[%s1] sm:$0xff]
      %v254 = vld [vmem:[%s2] sm:$0x3]
      %v256 = vperm.slane %v254, 0
      %v257 = vperm.slane %v254, 1
      %v261 = vunpack.c.l.b16 %v253
      %v262 = vunpack.c.h.b16 %v253
      %v263 = vpack.c.b16 %v261, %v261
      %v264 = vpack.c.b16 %v262, %v262
      %vm265 = vcmask 64512
      %v267 = vsel %vm265, %v245, 0
      %v270 = vsel %vm265, %v246, 0
      %v273 = vsel %vm265, %v247, 0
      %v276 = vsel %vm265, %v248, 0
      %v279 = vsel %vm265, %v249, 0
      %v282 = vsel %vm265, %v250, 0
      %v285 = vsel %vm265, %v251, 0
      %v288 = vsel %vm265, %v252, 0
      %vm290 = vcmask 1043456
      %v292 = vsel %vm290, %v263, 0
      %v295 = vsel %vm290, %v264, 0
      %297 = vmatpush.bf16.msra.mxu0 0
      %298 = vmatpush.bf16.msra.mxu0 0
      %299 = vmatpush.bf16.msra.mxu0 0
      %300 = vmatpush.bf16.msra.mxu0 0
      %301 = vmatpush.bf16.msra.mxu0 0
      %302 = vmatpush.bf16.msra.mxu0 0
      %303 = vmatpush.bf16.msra.mxu0 0
      %304 = vmatpush.bf16.msra.mxu0 %v292
      %305 = vmatmul.bf16.gmra.mxu0 %v267
      %v306 = vpop.f32.mrf.mxu0
      %v307 = vadd.f32 %v256, %v306
      %v308 = vpop.f32.mrf.mxu0
      %v309 = vadd.f32 %v256, %v308
      %310 = vmatmul.bf16.gmra.mxu0 %v270
      %v311 = vpop.f32.mrf.mxu0
      %v312 = vadd.f32 %v256, %v311
      %v313 = vpop.f32.mrf.mxu0
      %v314 = vadd.f32 %v256, %v313
      %315 = vmatmul.bf16.gmra.mxu0 %v273
      %v316 = vpop.f32.mrf.mxu0
      %v317 = vadd.f32 %v256, %v316
      %v318 = vpop.f32.mrf.mxu0
      %v319 = vadd.f32 %v256, %v318
      %320 = vmatmul.bf16.gmra.mxu0 %v276
      %v321 = vpop.f32.mrf.mxu0
      %v322 = vadd.f32 %v256, %v321
      %v323 = vpop.f32.mrf.mxu0
      %v324 = vadd.f32 %v256, %v323
      %325 = vmatmul.bf16.gmra.mxu0 %v279
      %v326 = vpop.f32.mrf.mxu0
      %v327 = vadd.f32 %v256, %v326
      %v328 = vpop.f32.mrf.mxu0
      %v329 = vadd.f32 %v256, %v328
      %330 = vmatmul.bf16.gmra.mxu0 %v282
      %v331 = vpop.f32.mrf.mxu0
      %v332 = vadd.f32 %v256, %v331
      %v333 = vpop.f32.mrf.mxu0
      %v334 = vadd.f32 %v256, %v333
      %335 = vmatmul.bf16.gmra.mxu0 %v285
      %v336 = vpop.f32.mrf.mxu0
      %v337 = vadd.f32 %v256, %v336
      %v338 = vpop.f32.mrf.mxu0
      %v339 = vadd.f32 %v256, %v338
      %340 = vmatmul.bf16.gmra.mxu0 %v288
      %v341 = vpop.f32.mrf.mxu0
      %v342 = vadd.f32 %v256, %v341
      %v343 = vpop.f32.mrf.mxu0
      %v344 = vadd.f32 %v256, %v343
      %345 = vdwg.mxu0
      %346 = vmatpush.bf16.msra.mxu0 0
      %347 = vmatpush.bf16.msra.mxu0 0
      %348 = vmatpush.bf16.msra.mxu0 0
      %349 = vmatpush.bf16.msra.mxu0 0
      %350 = vmatpush.bf16.msra.mxu0 0
      %351 = vmatpush.bf16.msra.mxu0 0
      %352 = vmatpush.bf16.msra.mxu0 0
      %353 = vmatpush.bf16.msra.mxu0 %v295
      %354 = vmatmul.bf16.gmra.mxu0 %v267
      %v355 = vpop.f32.mrf.mxu0
      %v356 = vadd.f32 %v257, %v355
      %v357 = vpop.f32.mrf.mxu0
      %v358 = vadd.f32 %v257, %v357
      %359 = vmatmul.bf16.gmra.mxu0 %v270
      %v360 = vpop.f32.mrf.mxu0
      %v361 = vadd.f32 %v257, %v360
      %v362 = vpop.f32.mrf.mxu0
      %v363 = vadd.f32 %v257, %v362
      %364 = vmatmul.bf16.gmra.mxu0 %v273
      %v365 = vpop.f32.mrf.mxu0
      %v366 = vadd.f32 %v257, %v365
      %v367 = vpop.f32.mrf.mxu0
      %v368 = vadd.f32 %v257, %v367
      %369 = vmatmul.bf16.gmra.mxu0 %v276
      %v370 = vpop.f32.mrf.mxu0
      %v371 = vadd.f32 %v257, %v370
      %v372 = vpop.f32.mrf.mxu0
      %v373 = vadd.f32 %v257, %v372
      %374 = vmatmul.bf16.gmra.mxu0 %v279
      %v375 = vpop.f32.mrf.mxu0
      %v376 = vadd.f32 %v257, %v375
      %v377 = vpop.f32.mrf.mxu0
      %v378 = vadd.f32 %v257, %v377
      %379 = vmatmul.bf16.gmra.mxu0 %v282
      %v380 = vpop.f32.mrf.mxu0
      %v381 = vadd.f32 %v257, %v380
      %v382 = vpop.f32.mrf.mxu0
      %v383 = vadd.f32 %v257, %v382
      %384 = vmatmul.bf16.gmra.mxu0 %v285
      %v385 = vpop.f32.mrf.mxu0
      %v386 = vadd.f32 %v257, %v385
      %v387 = vpop.f32.mrf.mxu0
      %v388 = vadd.f32 %v257, %v387
      %389 = vmatmul.bf16.gmra.mxu0 %v288
      %v390 = vpop.f32.mrf.mxu0
      %v391 = vadd.f32 %v257, %v390
      %v392 = vpop.f32.mrf.mxu0
      %v393 = vadd.f32 %v257, %v392
      %394 = vdwg.mxu0
      %v395 = vmax.f32 %v307, 0.0
      %v396 = vmax.f32 %v356, 0.0
      %v397 = vmax.f32 %v309, 0.0
      %v398 = vmax.f32 %v358, 0.0
      %v399 = vmax.f32 %v312, 0.0
      %v400 = vmax.f32 %v361, 0.0
      %v401 = vmax.f32 %v314, 0.0
      %v402 = vmax.f32 %v363, 0.0
      %v403 = vmax.f32 %v317, 0.0
      %v404 = vmax.f32 %v366, 0.0
      %v405 = vmax.f32 %v319, 0.0
      %v406 = vmax.f32 %v368, 0.0
      %v407 = vmax.f32 %v322, 0.0
      %v408 = vmax.f32 %v371, 0.0
      %v409 = vmax.f32 %v324, 0.0
      %v410 = vmax.f32 %v373, 0.0
      %v411 = vmax.f32 %v327, 0.0
      %v412 = vmax.f32 %v376, 0.0
      %v413 = vmax.f32 %v329, 0.0
      %v414 = vmax.f32 %v378, 0.0
      %v415 = vmax.f32 %v332, 0.0
      %v416 = vmax.f32 %v381, 0.0
      %v417 = vmax.f32 %v334, 0.0
      %v418 = vmax.f32 %v383, 0.0
      %v419 = vmax.f32 %v337, 0.0
      %v420 = vmax.f32 %v386, 0.0
      %v421 = vmax.f32 %v339, 0.0
      %v422 = vmax.f32 %v388, 0.0
      %v423 = vmax.f32 %v342, 0.0
      %v424 = vmax.f32 %v391, 0.0
      %v425 = vmax.f32 %v344, 0.0
      %v426 = vmax.f32 %v393, 0.0
      %v427 = vpack.c.bf16 %v397, %v395
      %v428 = vpack.c.bf16 %v398, %v396
      %v429 = vpack.c.bf16 %v401, %v399
      %v430 = vpack.c.bf16 %v402, %v400
      %v431 = vpack.c.bf16 %v405, %v403
      %v432 = vpack.c.bf16 %v406, %v404
      %v433 = vpack.c.bf16 %v409, %v407
      %v434 = vpack.c.bf16 %v410, %v408
      %v435 = vpack.c.bf16 %v413, %v411
      %v436 = vpack.c.bf16 %v414, %v412
      %v437 = vpack.c.bf16 %v417, %v415
      %v438 = vpack.c.bf16 %v418, %v416
      %v439 = vpack.c.bf16 %v421, %v419
      %v440 = vpack.c.bf16 %v422, %v420
      %v441 = vpack.c.bf16 %v425, %v423
      %v442 = vpack.c.bf16 %v426, %v424
      %v443 = vld [vmem:[%s3] sm:$0xf]
      %v444 = vld [vmem:[%s3 + $0x4] sm:$0xf]
      %v445 = vld [vmem:[%s3 + $0x8] sm:$0xf]
      %v446 = vld [vmem:[%s3 + $0xc] sm:$0xf]
      %v447 = vld [vmem:[%s3 + $0x10] sm:$0xf]
      %v448 = vld [vmem:[%s3 + $0x14] sm:$0xf]
      %v449 = vld [vmem:[%s3 + $0x18] sm:$0xf]
      %v450 = vld [vmem:[%s3 + $0x1c] sm:$0xf]
      %v451 = vld [vmem:[%s3 + $0x20] sm:$0xf]
      %v452 = vld [vmem:[%s3 + $0x24] sm:$0xf]
      %v453 = vld [vmem:[%s3 + $0x28] sm:$0xf]
      %v454 = vld [vmem:[%s3 + $0x2c] sm:$0xf]
      %v455 = vld [vmem:[%s3 + $0x30] sm:$0xf]
      %v456 = vld [vmem:[%s3 + $0x34] sm:$0xf]
      %v457 = vld [vmem:[%s3 + $0x38] sm:$0xf]
      %v458 = vld [vmem:[%s3 + $0x3c] sm:$0xf]
      %v459 = vld [vmem:[%s3 + $0x40] sm:$0xf]
      %v460 = vld [vmem:[%s3 + $0x44] sm:$0xf]
      %v461 = vld [vmem:[%s3 + $0x48] sm:$0xf]
      %v462 = vld [vmem:[%s3 + $0x4c] sm:$0xf]
      %v463 = vld [vmem:[%s3 + $0x50] sm:$0xf]
      %v464 = vld [vmem:[%s3 + $0x54] sm:$0xf]
      %v465 = vld [vmem:[%s3 + $0x58] sm:$0xf]
      %v466 = vld [vmem:[%s3 + $0x5c] sm:$0xf]
      %v467 = vld [vmem:[%s3 + $0x60] sm:$0xf]
      %v468 = vld [vmem:[%s3 + $0x64] sm:$0xf]
      %v469 = vld [vmem:[%s3 + $0x68] sm:$0xf]
      %v470 = vld [vmem:[%s3 + $0x6c] sm:$0xf]
      %v471 = vld [vmem:[%s3 + $0x70] sm:$0xf]
      %v472 = vld [vmem:[%s3 + $0x74] sm:$0xf]
      %v473 = vld [vmem:[%s3 + $0x78] sm:$0xf]
      %v474 = vld [vmem:[%s3 + $0x7c] sm:$0xf]
      %v475 = vld [vmem:[%s4] sm:$0x1]
      %v477 = vperm.slane %v475, 0
      %v511 = vunpack.c.l.b16 %v443
      %v512 = vunpack.c.l.b16 %v444
      %v513 = vunpack.c.l.b16 %v445
      %v514 = vunpack.c.l.b16 %v446
      %v515 = vunpack.c.l.b16 %v447
      %v516 = vunpack.c.l.b16 %v448
      %v517 = vunpack.c.l.b16 %v449
      %v518 = vunpack.c.l.b16 %v450
      %v519 = vunpack.c.l.b16 %v451
      %v520 = vunpack.c.l.b16 %v452
      %v521 = vunpack.c.l.b16 %v453
      %v522 = vunpack.c.l.b16 %v454
      %v523 = vunpack.c.l.b16 %v455
      %v524 = vunpack.c.l.b16 %v456
      %v525 = vunpack.c.l.b16 %v457
      %v526 = vunpack.c.l.b16 %v458
      %v527 = vunpack.c.l.b16 %v459
      %v528 = vunpack.c.l.b16 %v460
      %v529 = vunpack.c.l.b16 %v461
      %v530 = vunpack.c.l.b16 %v462
      %v531 = vunpack.c.l.b16 %v463
      %v532 = vunpack.c.l.b16 %v464
      %v533 = vunpack.c.l.b16 %v465
      %v534 = vunpack.c.l.b16 %v466
      %v535 = vunpack.c.l.b16 %v467
      %v536 = vunpack.c.l.b16 %v468
      %v537 = vunpack.c.l.b16 %v469
      %v538 = vunpack.c.l.b16 %v470
      %v539 = vunpack.c.l.b16 %v471
      %v540 = vunpack.c.l.b16 %v472
      %v541 = vunpack.c.l.b16 %v473
      %v542 = vunpack.c.l.b16 %v474
      %v543 = vpack.c.b16 %v512, %v511
      %v544 = vpack.c.b16 %v514, %v513
      %v545 = vpack.c.b16 %v516, %v515
      %v546 = vpack.c.b16 %v518, %v517
      %v547 = vpack.c.b16 %v520, %v519
      %v548 = vpack.c.b16 %v522, %v521
      %v549 = vpack.c.b16 %v524, %v523
      %v550 = vpack.c.b16 %v526, %v525
      %v551 = vpack.c.b16 %v528, %v527
      %v552 = vpack.c.b16 %v530, %v529
      %v553 = vpack.c.b16 %v532, %v531
      %v554 = vpack.c.b16 %v534, %v533
      %v555 = vpack.c.b16 %v536, %v535
      %v556 = vpack.c.b16 %v538, %v537
      %v557 = vpack.c.b16 %v540, %v539
      %v558 = vpack.c.b16 %v542, %v541
      %575 = vmatpush.bf16.msra.mxu0 %v550
      %576 = vmatpush.bf16.msra.mxu0 %v549
      %577 = vmatpush.bf16.msra.mxu0 %v548
      %578 = vmatpush.bf16.msra.mxu0 %v547
      %579 = vmatpush.bf16.msra.mxu0 %v546
      %580 = vmatpush.bf16.msra.mxu0 %v545
      %581 = vmatpush.bf16.msra.mxu0 %v544
      %582 = vmatpush.bf16.msra.mxu0 %v543
      %583 = vmatmul.bf16.gmra.mxu0 %v427
      %v584 = vpop.f32.mrf.mxu0
      %v585 = vadd.f32 %v477, %v584
      %v586 = vpop.f32.mrf.mxu0
      %v587 = vadd.f32 %v477, %v586
      %588 = vmatmul.bf16.gmra.mxu0 %v429
      %v589 = vpop.f32.mrf.mxu0
      %v590 = vadd.f32 %v477, %v589
      %v591 = vpop.f32.mrf.mxu0
      %v592 = vadd.f32 %v477, %v591
      %593 = vmatmul.bf16.gmra.mxu0 %v431
      %v594 = vpop.f32.mrf.mxu0
      %v595 = vadd.f32 %v477, %v594
      %v596 = vpop.f32.mrf.mxu0
      %v597 = vadd.f32 %v477, %v596
      %598 = vmatmul.bf16.gmra.mxu0 %v433
      %v599 = vpop.f32.mrf.mxu0
      %v600 = vadd.f32 %v477, %v599
      %v601 = vpop.f32.mrf.mxu0
      %v602 = vadd.f32 %v477, %v601
      %603 = vmatmul.bf16.gmra.mxu0 %v435
      %v604 = vpop.f32.mrf.mxu0
      %v605 = vadd.f32 %v477, %v604
      %v606 = vpop.f32.mrf.mxu0
      %v607 = vadd.f32 %v477, %v606
      %608 = vmatmul.bf16.gmra.mxu0 %v437
      %v609 = vpop.f32.mrf.mxu0
      %v610 = vadd.f32 %v477, %v609
      %v611 = vpop.f32.mrf.mxu0
      %v612 = vadd.f32 %v477, %v611
      %613 = vmatmul.bf16.gmra.mxu0 %v439
      %v614 = vpop.f32.mrf.mxu0
      %v615 = vadd.f32 %v477, %v614
      %v616 = vpop.f32.mrf.mxu0
      %v617 = vadd.f32 %v477, %v616
      %618 = vmatmul.bf16.gmra.mxu0 %v441
      %v619 = vpop.f32.mrf.mxu0
      %v620 = vadd.f32 %v477, %v619
      %v621 = vpop.f32.mrf.mxu0
      %v622 = vadd.f32 %v477, %v621
      %623 = vdwg.mxu0
      %624 = vmatpush.bf16.msra.mxu0 %v558
      %625 = vmatpush.bf16.msra.mxu0 %v557
      %626 = vmatpush.bf16.msra.mxu0 %v556
      %627 = vmatpush.bf16.msra.mxu0 %v555
      %628 = vmatpush.bf16.msra.mxu0 %v554
      %629 = vmatpush.bf16.msra.mxu0 %v553
      %630 = vmatpush.bf16.msra.mxu0 %v552
      %631 = vmatpush.bf16.msra.mxu0 %v551
      %632 = vmatmul.bf16.gmra.mxu0 %v428
      %v633 = vpop.f32.mrf.mxu0
      %v634 = vadd.f32 %v585, %v633
      %v635 = vpop.f32.mrf.mxu0
      %v636 = vadd.f32 %v587, %v635
      %637 = vmatmul.bf16.gmra.mxu0 %v430
      %v638 = vpop.f32.mrf.mxu0
      %v639 = vadd.f32 %v590, %v638
      %v640 = vpop.f32.mrf.mxu0
      %v641 = vadd.f32 %v592, %v640
      %642 = vmatmul.bf16.gmra.mxu0 %v432
      %v643 = vpop.f32.mrf.mxu0
      %v644 = vadd.f32 %v595, %v643
      %v645 = vpop.f32.mrf.mxu0
      %v646 = vadd.f32 %v597, %v645
      %647 = vmatmul.bf16.gmra.mxu0 %v434
      %v648 = vpop.f32.mrf.mxu0
      %v649 = vadd.f32 %v600, %v648
      %v650 = vpop.f32.mrf.mxu0
      %v651 = vadd.f32 %v602, %v650
      %652 = vmatmul.bf16.gmra.mxu0 %v436
      %v653 = vpop.f32.mrf.mxu0
      %v654 = vadd.f32 %v605, %v653
      %v655 = vpop.f32.mrf.mxu0
      %v656 = vadd.f32 %v607, %v655
      %657 = vmatmul.bf16.gmra.mxu0 %v438
      %v658 = vpop.f32.mrf.mxu0
      %v659 = vadd.f32 %v610, %v658
      %v660 = vpop.f32.mrf.mxu0
      %v661 = vadd.f32 %v612, %v660
      %662 = vmatmul.bf16.gmra.mxu0 %v440
      %v663 = vpop.f32.mrf.mxu0
      %v664 = vadd.f32 %v615, %v663
      %v665 = vpop.f32.mrf.mxu0
      %v666 = vadd.f32 %v617, %v665
      %667 = vmatmul.bf16.gmra.mxu0 %v442
      %v668 = vpop.f32.mrf.mxu0
      %v669 = vadd.f32 %v620, %v668
      %v670 = vpop.f32.mrf.mxu0
      %v671 = vadd.f32 %v622, %v670
      %672 = vdwg.mxu0
      %v673 = vlaneseq
      %v674 = vand.u32 %v673, 127
      %vm675 = vcmp.lt.s32.totalorder %v674, 2
      %v676 = vsel %vm675, %v634, -1e+30
      %v677 = vsel %vm675, %v636, -1e+30
      %v678 = vsel %vm675, %v639, -1e+30
      %v679 = vsel %vm675, %v641, -1e+30
      %v680 = vsel %vm675, %v644, -1e+30
      %v681 = vsel %vm675, %v646, -1e+30
      %v682 = vsel %vm675, %v649, -1e+30
      %v683 = vsel %vm675, %v651, -1e+30
      %v684 = vsel %vm675, %v654, -1e+30
      %v685 = vsel %vm675, %v656, -1e+30
      %v686 = vsel %vm675, %v659, -1e+30
      %v687 = vsel %vm675, %v661, -1e+30
      %v688 = vsel %vm675, %v664, -1e+30
      %v689 = vsel %vm675, %v666, -1e+30
      %v690 = vsel %vm675, %v669, -1e+30
      %v691 = vsel %vm675, %v671, -1e+30
      %v692 = vsel %vm265, %v676, -inf
      %693 = vmax.xlane.f32.xlu0 %v692
      %v694 = vpop.xlane.xlu0 %693
      %v695 = vsel %vm265, %v677, -inf
      %696 = vmax.xlane.f32.xlu0 %v695
      %v697 = vpop.xlane.xlu0 %696
      %v698 = vsel %vm265, %v678, -inf
      %699 = vmax.xlane.f32.xlu0 %v698
      %v700 = vpop.xlane.xlu0 %699
      %v701 = vsel %vm265, %v679, -inf
      %702 = vmax.xlane.f32.xlu0 %v701
      %v703 = vpop.xlane.xlu0 %702
      %v704 = vsel %vm265, %v680, -inf
      %705 = vmax.xlane.f32.xlu0 %v704
      %v706 = vpop.xlane.xlu0 %705
      %v707 = vsel %vm265, %v681, -inf
      %708 = vmax.xlane.f32.xlu0 %v707
      %v709 = vpop.xlane.xlu0 %708
      %v710 = vsel %vm265, %v682, -inf
      %711 = vmax.xlane.f32.xlu0 %v710
      %v712 = vpop.xlane.xlu0 %711
      %v713 = vsel %vm265, %v683, -inf
      %714 = vmax.xlane.f32.xlu0 %v713
      %v715 = vpop.xlane.xlu0 %714
      %v716 = vsel %vm265, %v684, -inf
      %717 = vmax.xlane.f32.xlu0 %v716
      %v718 = vpop.xlane.xlu0 %717
      %v719 = vsel %vm265, %v685, -inf
      %720 = vmax.xlane.f32.xlu0 %v719
      %v721 = vpop.xlane.xlu0 %720
      %v722 = vsel %vm265, %v686, -inf
      %723 = vmax.xlane.f32.xlu0 %v722
      %v724 = vpop.xlane.xlu0 %723
      %v725 = vsel %vm265, %v687, -inf
      %726 = vmax.xlane.f32.xlu0 %v725
      %v727 = vpop.xlane.xlu0 %726
      %v728 = vsel %vm265, %v688, -inf
      %729 = vmax.xlane.f32.xlu0 %v728
      %v730 = vpop.xlane.xlu0 %729
      %v731 = vsel %vm265, %v689, -inf
      %732 = vmax.xlane.f32.xlu0 %v731
      %v733 = vpop.xlane.xlu0 %732
      %v734 = vsel %vm265, %v690, -inf
      %735 = vmax.xlane.f32.xlu0 %v734
      %v736 = vpop.xlane.xlu0 %735
      %v737 = vsel %vm265, %v691, -inf
      %738 = vmax.xlane.f32.xlu0 %v737
      %v739 = vpop.xlane.xlu0 %738
      %v740 = vsub.f32 %v676, %v694
      %v741 = vsub.f32 %v677, %v697
      %v742 = vsub.f32 %v678, %v700
      %v743 = vsub.f32 %v679, %v703
      %v744 = vsub.f32 %v680, %v706
      %v745 = vsub.f32 %v681, %v709
      %v746 = vsub.f32 %v682, %v712
      %v747 = vsub.f32 %v683, %v715
      %v748 = vsub.f32 %v684, %v718
      %v749 = vsub.f32 %v685, %v721
      %v750 = vsub.f32 %v686, %v724
      %v751 = vsub.f32 %v687, %v727
      %v752 = vsub.f32 %v688, %v730
      %v753 = vsub.f32 %v689, %v733
      %v754 = vsub.f32 %v690, %v736
      %v755 = vsub.f32 %v691, %v739
      %v756 = vmul.f32 %v740, 1.442695
      %v757 = vpow.pop %v756
      %v758 = vmul.f32 %v741, 1.442695
      %v759 = vpow.pop %v758
      %v760 = vmul.f32 %v742, 1.442695
      %v761 = vpow.pop %v760
      %v762 = vmul.f32 %v743, 1.442695
      %v763 = vpow.pop %v762
      %v764 = vmul.f32 %v744, 1.442695
      %v765 = vpow.pop %v764
      %v766 = vmul.f32 %v745, 1.442695
      %v767 = vpow.pop %v766
      %v768 = vmul.f32 %v746, 1.442695
      %v769 = vpow.pop %v768
      %v770 = vmul.f32 %v747, 1.442695
      %v771 = vpow.pop %v770
      %v772 = vmul.f32 %v748, 1.442695
      %v773 = vpow.pop %v772
      %v774 = vmul.f32 %v749, 1.442695
      %v775 = vpow.pop %v774
      %v776 = vmul.f32 %v750, 1.442695
      %v777 = vpow.pop %v776
      %v778 = vmul.f32 %v751, 1.442695
      %v779 = vpow.pop %v778
      %v780 = vmul.f32 %v752, 1.442695
      %v781 = vpow.pop %v780
      %v782 = vmul.f32 %v753, 1.442695
      %v783 = vpow.pop %v782
      %v784 = vmul.f32 %v754, 1.442695
      %v785 = vpow.pop %v784
      %v786 = vmul.f32 %v755, 1.442695
      %v787 = vpow.pop %v786
      %v788 = vsel %vm675, %v757, 0.0
      %v789 = vsel %vm675, %v759, 0.0
      %v790 = vsel %vm675, %v761, 0.0
      %v791 = vsel %vm675, %v763, 0.0
      %v792 = vsel %vm675, %v765, 0.0
      %v793 = vsel %vm675, %v767, 0.0
      %v794 = vsel %vm675, %v769, 0.0
      %v795 = vsel %vm675, %v771, 0.0
      %v796 = vsel %vm675, %v773, 0.0
      %v797 = vsel %vm675, %v775, 0.0
      %v798 = vsel %vm675, %v777, 0.0
      %v799 = vsel %vm675, %v779, 0.0
      %v800 = vsel %vm675, %v781, 0.0
      %v801 = vsel %vm675, %v783, 0.0
      %v802 = vsel %vm675, %v785, 0.0
      %v803 = vsel %vm675, %v787, 0.0
      %v804 = vsel %vm265, %v788, 0.0
      %805 = vadd.xlane.f32.xlu0 %v804
      %v806 = vpop.xlane.xlu0 %805
      %v807 = vsel %vm265, %v789, 0.0
      %808 = vadd.xlane.f32.xlu0 %v807
      %v809 = vpop.xlane.xlu0 %808
      %v810 = vsel %vm265, %v790, 0.0
      %811 = vadd.xlane.f32.xlu0 %v810
      %v812 = vpop.xlane.xlu0 %811
      %v813 = vsel %vm265, %v791, 0.0
      %814 = vadd.xlane.f32.xlu0 %v813
      %v815 = vpop.xlane.xlu0 %814
      %v816 = vsel %vm265, %v792, 0.0
      %817 = vadd.xlane.f32.xlu0 %v816
      %v818 = vpop.xlane.xlu0 %817
      %v819 = vsel %vm265, %v793, 0.0
      %820 = vadd.xlane.f32.xlu0 %v819
      %v821 = vpop.xlane.xlu0 %820
      %v822 = vsel %vm265, %v794, 0.0
      %823 = vadd.xlane.f32.xlu0 %v822
      %v824 = vpop.xlane.xlu0 %823
      %v825 = vsel %vm265, %v795, 0.0
      %826 = vadd.xlane.f32.xlu0 %v825
      %v827 = vpop.xlane.xlu0 %826
      %v828 = vsel %vm265, %v796, 0.0
      %829 = vadd.xlane.f32.xlu0 %v828
      %v830 = vpop.xlane.xlu0 %829
      %v831 = vsel %vm265, %v797, 0.0
      %832 = vadd.xlane.f32.xlu0 %v831
      %v833 = vpop.xlane.xlu0 %832
      %v834 = vsel %vm265, %v798, 0.0
      %835 = vadd.xlane.f32.xlu0 %v834
      %v836 = vpop.xlane.xlu0 %835
      %v837 = vsel %vm265, %v799, 0.0
      %838 = vadd.xlane.f32.xlu0 %v837
      %v839 = vpop.xlane.xlu0 %838
      %v840 = vsel %vm265, %v800, 0.0
      %841 = vadd.xlane.f32.xlu0 %v840
      %v842 = vpop.xlane.xlu0 %841
      %v843 = vsel %vm265, %v801, 0.0
      %844 = vadd.xlane.f32.xlu0 %v843
      %v845 = vpop.xlane.xlu0 %844
      %v846 = vsel %vm265, %v802, 0.0
      %847 = vadd.xlane.f32.xlu0 %v846
      %v848 = vpop.xlane.xlu0 %847
      %v849 = vsel %vm265, %v803, 0.0
      %850 = vadd.xlane.f32.xlu0 %v849
      %v851 = vpop.xlane.xlu0 %850
      %v852 = vrcp.pop %v806
      %v853 = vmul.f32 %v806, %v852
      %v854 = vsub.f32 1.0, %v853
      %v855 = vmul.f32 %v852, %v854
      %v856 = vadd.f32 %v852, %v855
      %vm857 = vweird.f32 %v806
      %vm858 = vweird.f32 %v852
      %vm859 = vmor %vm857, %vm858
      %v860 = vsel %vm859, %v852, %v856
      %v861 = vand.u32 2147483647, %v806
      %vm862 = vcmp.eq.f32.partialorder %v861, 8.507059e+37
      %v863 = vand.u32 %v806, 2147483648
      %v864 = vor.u32 1.1754944e-38, %v863
      %v865 = vsel %vm862, %v864, %v860
      %v866 = vmul.f32 %v788, %v865
      %v867 = vrcp.pop %v809
      %v868 = vmul.f32 %v809, %v867
      %v869 = vsub.f32 1.0, %v868
      %v870 = vmul.f32 %v867, %v869
      %v871 = vadd.f32 %v867, %v870
      %vm872 = vweird.f32 %v809
      %vm873 = vweird.f32 %v867
      %vm874 = vmor %vm872, %vm873
      %v875 = vsel %vm874, %v867, %v871
      %v876 = vand.u32 2147483647, %v809
      %vm877 = vcmp.eq.f32.partialorder %v876, 8.507059e+37
      %v878 = vand.u32 %v809, 2147483648
      %v879 = vor.u32 1.1754944e-38, %v878
      %v880 = vsel %vm877, %v879, %v875
      %v881 = vmul.f32 %v789, %v880
      %v882 = vrcp.pop %v812
      %v883 = vmul.f32 %v812, %v882
      %v884 = vsub.f32 1.0, %v883
      %v885 = vmul.f32 %v882, %v884
      %v886 = vadd.f32 %v882, %v885
      %vm887 = vweird.f32 %v812
      %vm888 = vweird.f32 %v882
      %vm889 = vmor %vm887, %vm888
      %v890 = vsel %vm889, %v882, %v886
      %v891 = vand.u32 2147483647, %v812
      %vm892 = vcmp.eq.f32.partialorder %v891, 8.507059e+37
      %v893 = vand.u32 %v812, 2147483648
      %v894 = vor.u32 1.1754944e-38, %v893
      %v895 = vsel %vm892, %v894, %v890
      %v896 = vmul.f32 %v790, %v895
      %v897 = vrcp.pop %v815
      %v898 = vmul.f32 %v815, %v897
      %v899 = vsub.f32 1.0, %v898
      %v900 = vmul.f32 %v897, %v899
      %v901 = vadd.f32 %v897, %v900
      %vm902 = vweird.f32 %v815
      %vm903 = vweird.f32 %v897
      %vm904 = vmor %vm902, %vm903
      %v905 = vsel %vm904, %v897, %v901
      %v906 = vand.u32 2147483647, %v815
      %vm907 = vcmp.eq.f32.partialorder %v906, 8.507059e+37
      %v908 = vand.u32 %v815, 2147483648
      %v909 = vor.u32 1.1754944e-38, %v908
      %v910 = vsel %vm907, %v909, %v905
      %v911 = vmul.f32 %v791, %v910
      %v912 = vrcp.pop %v818
      %v913 = vmul.f32 %v818, %v912
      %v914 = vsub.f32 1.0, %v913
      %v915 = vmul.f32 %v912, %v914
      %v916 = vadd.f32 %v912, %v915
      %vm917 = vweird.f32 %v818
      %vm918 = vweird.f32 %v912
      %vm919 = vmor %vm917, %vm918
      %v920 = vsel %vm919, %v912, %v916
      %v921 = vand.u32 2147483647, %v818
      %vm922 = vcmp.eq.f32.partialorder %v921, 8.507059e+37
      %v923 = vand.u32 %v818, 2147483648
      %v924 = vor.u32 1.1754944e-38, %v923
      %v925 = vsel %vm922, %v924, %v920
      %v926 = vmul.f32 %v792, %v925
      %v927 = vrcp.pop %v821
      %v928 = vmul.f32 %v821, %v927
      %v929 = vsub.f32 1.0, %v928
      %v930 = vmul.f32 %v927, %v929
      %v931 = vadd.f32 %v927, %v930
      %vm932 = vweird.f32 %v821
      %vm933 = vweird.f32 %v927
      %vm934 = vmor %vm932, %vm933
      %v935 = vsel %vm934, %v927, %v931
      %v936 = vand.u32 2147483647, %v821
      %vm937 = vcmp.eq.f32.partialorder %v936, 8.507059e+37
      %v938 = vand.u32 %v821, 2147483648
      %v939 = vor.u32 1.1754944e-38, %v938
      %v940 = vsel %vm937, %v939, %v935
      %v941 = vmul.f32 %v793, %v940
      %v942 = vrcp.pop %v824
      %v943 = vmul.f32 %v824, %v942
      %v944 = vsub.f32 1.0, %v943
      %v945 = vmul.f32 %v942, %v944
      %v946 = vadd.f32 %v942, %v945
      %vm947 = vweird.f32 %v824
      %vm948 = vweird.f32 %v942
      %vm949 = vmor %vm947, %vm948
      %v950 = vsel %vm949, %v942, %v946
      %v951 = vand.u32 2147483647, %v824
      %vm952 = vcmp.eq.f32.partialorder %v951, 8.507059e+37
      %v953 = vand.u32 %v824, 2147483648
      %v954 = vor.u32 1.1754944e-38, %v953
      %v955 = vsel %vm952, %v954, %v950
      %v956 = vmul.f32 %v794, %v955
      %v957 = vrcp.pop %v827
      %v958 = vmul.f32 %v827, %v957
      %v959 = vsub.f32 1.0, %v958
      %v960 = vmul.f32 %v957, %v959
      %v961 = vadd.f32 %v957, %v960
      %vm962 = vweird.f32 %v827
      %vm963 = vweird.f32 %v957
      %vm964 = vmor %vm962, %vm963
      %v965 = vsel %vm964, %v957, %v961
      %v966 = vand.u32 2147483647, %v827
      %vm967 = vcmp.eq.f32.partialorder %v966, 8.507059e+37
      %v968 = vand.u32 %v827, 2147483648
      %v969 = vor.u32 1.1754944e-38, %v968
      %v970 = vsel %vm967, %v969, %v965
      %v971 = vmul.f32 %v795, %v970
      %v972 = vrcp.pop %v830
      %v973 = vmul.f32 %v830, %v972
      %v974 = vsub.f32 1.0, %v973
      %v975 = vmul.f32 %v972, %v974
      %v976 = vadd.f32 %v972, %v975
      %vm977 = vweird.f32 %v830
      %vm978 = vweird.f32 %v972
      %vm979 = vmor %vm977, %vm978
      %v980 = vsel %vm979, %v972, %v976
      %v981 = vand.u32 2147483647, %v830
      %vm982 = vcmp.eq.f32.partialorder %v981, 8.507059e+37
      %v983 = vand.u32 %v830, 2147483648
      %v984 = vor.u32 1.1754944e-38, %v983
      %v985 = vsel %vm982, %v984, %v980
      %v986 = vmul.f32 %v796, %v985
      %v987 = vrcp.pop %v833
      %v988 = vmul.f32 %v833, %v987
      %v989 = vsub.f32 1.0, %v988
      %v990 = vmul.f32 %v987, %v989
      %v991 = vadd.f32 %v987, %v990
      %vm992 = vweird.f32 %v833
      %vm993 = vweird.f32 %v987
      %vm994 = vmor %vm992, %vm993
      %v995 = vsel %vm994, %v987, %v991
      %v996 = vand.u32 2147483647, %v833
      %vm997 = vcmp.eq.f32.partialorder %v996, 8.507059e+37
      %v998 = vand.u32 %v833, 2147483648
      %v999 = vor.u32 1.1754944e-38, %v998
      %v1000 = vsel %vm997, %v999, %v995
      %v1001 = vmul.f32 %v797, %v1000
      %v1002 = vrcp.pop %v836
      %v1003 = vmul.f32 %v836, %v1002
      %v1004 = vsub.f32 1.0, %v1003
      %v1005 = vmul.f32 %v1002, %v1004
      %v1006 = vadd.f32 %v1002, %v1005
      %vm1007 = vweird.f32 %v836
      %vm1008 = vweird.f32 %v1002
      %vm1009 = vmor %vm1007, %vm1008
      %v1010 = vsel %vm1009, %v1002, %v1006
      %v1011 = vand.u32 2147483647, %v836
      %vm1012 = vcmp.eq.f32.partialorder %v1011, 8.507059e+37
      %v1013 = vand.u32 %v836, 2147483648
      %v1014 = vor.u32 1.1754944e-38, %v1013
      %v1015 = vsel %vm1012, %v1014, %v1010
      %v1016 = vmul.f32 %v798, %v1015
      %v1017 = vrcp.pop %v839
      %v1018 = vmul.f32 %v839, %v1017
      %v1019 = vsub.f32 1.0, %v1018
      %v1020 = vmul.f32 %v1017, %v1019
      %v1021 = vadd.f32 %v1017, %v1020
      %vm1022 = vweird.f32 %v839
      %vm1023 = vweird.f32 %v1017
      %vm1024 = vmor %vm1022, %vm1023
      %v1025 = vsel %vm1024, %v1017, %v1021
      %v1026 = vand.u32 2147483647, %v839
      %vm1027 = vcmp.eq.f32.partialorder %v1026, 8.507059e+37
      %v1028 = vand.u32 %v839, 2147483648
      %v1029 = vor.u32 1.1754944e-38, %v1028
      %v1030 = vsel %vm1027, %v1029, %v1025
      %v1031 = vmul.f32 %v799, %v1030
      %v1032 = vrcp.pop %v842
      %v1033 = vmul.f32 %v842, %v1032
      %v1034 = vsub.f32 1.0, %v1033
      %v1035 = vmul.f32 %v1032, %v1034
      %v1036 = vadd.f32 %v1032, %v1035
      %vm1037 = vweird.f32 %v842
      %vm1038 = vweird.f32 %v1032
      %vm1039 = vmor %vm1037, %vm1038
      %v1040 = vsel %vm1039, %v1032, %v1036
      %v1041 = vand.u32 2147483647, %v842
      %vm1042 = vcmp.eq.f32.partialorder %v1041, 8.507059e+37
      %v1043 = vand.u32 %v842, 2147483648
      %v1044 = vor.u32 1.1754944e-38, %v1043
      %v1045 = vsel %vm1042, %v1044, %v1040
      %v1046 = vmul.f32 %v800, %v1045
      %v1047 = vrcp.pop %v845
      %v1048 = vmul.f32 %v845, %v1047
      %v1049 = vsub.f32 1.0, %v1048
      %v1050 = vmul.f32 %v1047, %v1049
      %v1051 = vadd.f32 %v1047, %v1050
      %vm1052 = vweird.f32 %v845
      %vm1053 = vweird.f32 %v1047
      %vm1054 = vmor %vm1052, %vm1053
      %v1055 = vsel %vm1054, %v1047, %v1051
      %v1056 = vand.u32 2147483647, %v845
      %vm1057 = vcmp.eq.f32.partialorder %v1056, 8.507059e+37
      %v1058 = vand.u32 %v845, 2147483648
      %v1059 = vor.u32 1.1754944e-38, %v1058
      %v1060 = vsel %vm1057, %v1059, %v1055
      %v1061 = vmul.f32 %v801, %v1060
      %v1062 = vrcp.pop %v848
      %v1063 = vmul.f32 %v848, %v1062
      %v1064 = vsub.f32 1.0, %v1063
      %v1065 = vmul.f32 %v1062, %v1064
      %v1066 = vadd.f32 %v1062, %v1065
      %vm1067 = vweird.f32 %v848
      %vm1068 = vweird.f32 %v1062
      %vm1069 = vmor %vm1067, %vm1068
      %v1070 = vsel %vm1069, %v1062, %v1066
      %v1071 = vand.u32 2147483647, %v848
      %vm1072 = vcmp.eq.f32.partialorder %v1071, 8.507059e+37
      %v1073 = vand.u32 %v848, 2147483648
      %v1074 = vor.u32 1.1754944e-38, %v1073
      %v1075 = vsel %vm1072, %v1074, %v1070
      %v1076 = vmul.f32 %v802, %v1075
      %v1077 = vrcp.pop %v851
      %v1078 = vmul.f32 %v851, %v1077
      %v1079 = vsub.f32 1.0, %v1078
      %v1080 = vmul.f32 %v1077, %v1079
      %v1081 = vadd.f32 %v1077, %v1080
      %vm1082 = vweird.f32 %v851
      %vm1083 = vweird.f32 %v1077
      %vm1084 = vmor %vm1082, %vm1083
      %v1085 = vsel %vm1084, %v1077, %v1081
      %v1086 = vand.u32 2147483647, %v851
      %vm1087 = vcmp.eq.f32.partialorder %v1086, 8.507059e+37
      %v1088 = vand.u32 %v851, 2147483648
      %v1089 = vor.u32 1.1754944e-38, %v1088
      %v1090 = vsel %vm1087, %v1089, %v1085
      %v1091 = vmul.f32 %v803, %v1090
      %v1092 = vsel %vm675, %v866, %v634
      %v1093 = vsel %vm675, %v881, %v636
      %v1094 = vsel %vm675, %v896, %v639
      %v1095 = vsel %vm675, %v911, %v641
      %v1096 = vsel %vm675, %v926, %v644
      %v1097 = vsel %vm675, %v941, %v646
      %v1098 = vsel %vm675, %v956, %v649
      %v1099 = vsel %vm675, %v971, %v651
      %v1100 = vsel %vm675, %v986, %v654
      %v1101 = vsel %vm675, %v1001, %v656
      %v1102 = vsel %vm675, %v1016, %v659
      %v1103 = vsel %vm675, %v1031, %v661
      %v1104 = vsel %vm675, %v1046, %v664
      %v1105 = vsel %vm675, %v1061, %v666
      %v1106 = vsel %vm675, %v1076, %v669
      %v1107 = vsel %vm675, %v1091, %v671
      %1108 = vst.msk [vmem:[%s226] sm:$0xff] %vm265, %v1092
      %1109 = vst.msk [vmem:[%s226 + $0x8] sm:$0xff] %vm265, %v1093
      %1110 = vst.msk [vmem:[%s226 + $0x10] sm:$0xff] %vm265, %v1094
      %1111 = vst.msk [vmem:[%s226 + $0x18] sm:$0xff] %vm265, %v1095
      %1112 = vst.msk [vmem:[%s226 + $0x20] sm:$0xff] %vm265, %v1096
      %1113 = vst.msk [vmem:[%s226 + $0x28] sm:$0xff] %vm265, %v1097
      %1114 = vst.msk [vmem:[%s226 + $0x30] sm:$0xff] %vm265, %v1098
      %1115 = vst.msk [vmem:[%s226 + $0x38] sm:$0xff] %vm265, %v1099
      %1116 = vst.msk [vmem:[%s226 + $0x40] sm:$0xff] %vm265, %v1100
      %1117 = vst.msk [vmem:[%s226 + $0x48] sm:$0xff] %vm265, %v1101
      %1118 = vst.msk [vmem:[%s226 + $0x50] sm:$0xff] %vm265, %v1102
      %1119 = vst.msk [vmem:[%s226 + $0x58] sm:$0xff] %vm265, %v1103
      %1120 = vst.msk [vmem:[%s226 + $0x60] sm:$0xff] %vm265, %v1104
      %1121 = vst.msk [vmem:[%s226 + $0x68] sm:$0xff] %vm265, %v1105
      %1122 = vst.msk [vmem:[%s226 + $0x70] sm:$0xff] %vm265, %v1106
      %1123 = vst.msk [vmem:[%s226 + $0x78] sm:$0xff] %vm265, %v1107
      %s1124 = smul.u32 16, %s16
      %p1125 = scmp.lt.s32.totalorder %s1124, 31
      %s1126 = scalar_select %p1125, %s1124, 31
      %s1127 = smul.addr %s1126, 8
      %s1128 = scalar_lea.vmem %s5, %s1127
      // Predicated region
      $region41: #{a2c_forward.1} parent=39 // pred_check
        %p1129 = pneg %p144
      $region42: #{a2c_forward.1} parent=39 // pred_check_branch
        %1131 = sbr.rel (%p1129) target = $region44
      $region43: #{a2c_forward.1} parent=39 // pred_region
        %s1132 = smul.u32 16, %s16
      $region44: #{a2c_forward.1} parent=39 // pred_fallthru
        _
    $region40: #{a2c_forward.1} parent=5 // pred_fallthru
      _
    %p1133 = scmp.le.s32.totalorder 2, %s11
    // Predicated region
    $region45: #{a2c_forward.1} parent=5 // pred_check
      %p1134 = pneg %p1133
    $region46: #{a2c_forward.1} parent=5 // pred_check_branch
      %1136 = sbr.rel (%p1134) target = $region48
    $region47: #{a2c_forward.1} parent=5 // pred_region
      %s1137 = ssub.s32 %s11, 2
      // Predicated region
      $region49: #{a2c_forward.1} parent=47 // pred_check
        %p1138 = pneg %p150
      $region50: #{a2c_forward.1} parent=47 // pred_check_branch
        %1140 = sbr.rel (%p1138) target = $region52
      $region51: #{a2c_forward.1} parent=47 // pred_region
        %s1141 = smul.u32 16, %s17
        %p1142 = scmp.lt.s32.totalorder %s1141, 31
        %s1143 = scalar_select %p1142, %s1141, 31
        %s1144 = smul.addr %s1143, 8
        %s1145 = scalar_lea.vmem %s5, %s1144
      $region52: #{a2c_forward.1} parent=47 // pred_fallthru
        _
    $region48: #{a2c_forward.1} parent=5 // pred_fallthru
      _
  $region6: #{a2c_forward.1} parent=0 // loop_footer
    %s15 = sadd.s32 1, %s11
  $region7: #{a2c_forward.1} parent=0 // loop_footer_branch
    %10 = sbr.rel target = $region3
  $region8: #{a2c_forward.1} parent=0 // loop_exit
    _

</llo_original>
